<compile_context>
chip_gen: v7x
topology: tpu7x:2x2x1
jax: 0.10.0
libtpu: 0.0.40
codegen_flags: <defaults>
</compile_context>

<pallas_src>
import jax
import jax.numpy as jnp
from jax import lax
from jax.experimental import pallas as pl
from jax.experimental.pallas import tpu as pltpu

_MIB = 1024 * 1024


def _cdiv(a, b):
    return -(-a // b)


def _round_up(a, b):
    return _cdiv(a, b) * b


def _vmem_capacity_bytes():
    """Physical VMEM bytes of the attached TPU (conservative fallback)."""
    try:
        info = pltpu.get_tpu_info()
        cap = int(getattr(info, "vmem_capacity_bytes"))
        if cap > 0:
            return cap
    except Exception:
        pass
    return 64 * _MIB  # v7x-class is the smallest; safe default


# ----------------------------------------------------------------------------
# Streaming two-pass kernels
# ----------------------------------------------------------------------------
def _make_stats_kernel(TN, tiles_per_core, n_packed):
    """Per-core sum / sum-of-squares partials, (8, E_lane) accumulators."""
    ragged = (n_packed % TN) != 0

    def kernel(x_ref, sum_ref, sumsq_ref):
        @pl.when(pl.program_id(1) == 0)
        def _init():
            sum_ref[...] = jnp.zeros_like(sum_ref)
            sumsq_ref[...] = jnp.zeros_like(sumsq_ref)

        x = x_ref[...].astype(jnp.float32)                    # (TN, E_lane)
        if ragged:
            tile = pl.program_id(0) * tiles_per_core + pl.program_id(1)
            row = tile * TN + lax.broadcasted_iota(jnp.int32, x.shape, 0)
            x = jnp.where(row < n_packed, x, 0.0)             # mask OOB rows

        if TN % 8 == 0:
            # Defer the cross-sublane reduce to the glue: plain vreg adds here.
            xr = x.reshape(TN // 8, 8, x.shape[1])
            sum_ref[...] += jnp.sum(xr, axis=0)
            sumsq_ref[...] += jnp.sum(xr * xr, axis=0)
        else:
            # Tiny single full-extent block (TN == n_packed, not 8-aligned).
            sum_ref[0:1, :] += jnp.sum(x, axis=0, keepdims=True)
            sumsq_ref[0:1, :] += jnp.sum(x * x, axis=0, keepdims=True)

    return kernel


def _apply_kernel(x_ref, prm_ref, o_ref):
    """Fused BN (folded scale/shift) + sigmoid + Dice gate."""
    x = x_ref[...].astype(jnp.float32)                        # (TN, E_lane)
    scale = prm_ref[0:1, :]
    shift = prm_ref[1:2, :]
    alpha = prm_ref[2:3, :]
    oma = prm_ref[3:4, :]                                     # 1 - alpha
    y = x * scale + shift                                     # BatchNorm output
    p = jax.nn.sigmoid(y)
    o_ref[...] = (x * (alpha + p * oma)).astype(o_ref.dtype)


# ----------------------------------------------------------------------------
# Fused single-sweep kernel (x resident in VMEM): 2x HBM traffic instead of 3x
# ----------------------------------------------------------------------------
def _make_fused_kernel(TN, E, E_lane, n_packed, n_rows_true, epsilon):
    ragged = (n_packed % TN) != 0
    inv_n = 1.0 / float(n_rows_true)

    def kernel(x_ref, prm_ref, o_ref, xs_ref, sum_ref, sumsq_ref):
        ph = pl.program_id(0)
        i = pl.program_id(1)

        @pl.when(jnp.logical_and(ph == 0, i == 0))
        def _init():
            sum_ref[...] = jnp.zeros_like(sum_ref)
            sumsq_ref[...] = jnp.zeros_like(sumsq_ref)

        @pl.when(ph == 0)
        def _accumulate():
            row0 = pl.multiple_of(i * TN, TN)
            xs_ref[pl.ds(row0, TN), :] = x_ref[...]           # stash (native dtype)
            x = x_ref[...].astype(jnp.float32)
            if ragged:
                row = i * TN + lax.broadcasted_iota(jnp.int32, x.shape, 0)
                x = jnp.where(row < n_packed, x, 0.0)
            sum_ref[...] += jnp.sum(x, axis=0, keepdims=True)
            sumsq_ref[...] += jnp.sum(x * x, axis=0, keepdims=True)

        @pl.when(ph == 1)
        def _apply():
            # Fold the lane-pack groups (pack is a power of two): after the
            # doubling rolls every lane holds its feature's full sum.
            s = sum_ref[...]
            sq = sumsq_ref[...]
            shift_amt = E
            while shift_amt < E_lane:
                s = s + pltpu.roll(s, shift_amt, axis=1)
                sq = sq + pltpu.roll(sq, shift_amt, axis=1)
                shift_amt *= 2
            mean = s * inv_n
            var = jnp.maximum(sq * inv_n - mean * mean, 0.0)  # biased, clamped
            gamma = prm_ref[0:1, :]
            beta = prm_ref[1:2, :]
            alpha = prm_ref[2:3, :]
            scale = gamma * lax.rsqrt(var + epsilon)
            shift = beta - mean * scale

            row0 = pl.multiple_of(i * TN, TN)
            x = xs_ref[pl.ds(row0, TN), :].astype(jnp.float32)
            y = x * scale + shift
            p = jax.nn.sigmoid(y)
            o_ref[...] = (x * (alpha + p * (1.0 - alpha))).astype(o_ref.dtype)

    return kernel


# ----------------------------------------------------------------------------
# Wrapper
# ----------------------------------------------------------------------------
def dice_forward(x, alpha, gamma, beta, *, dim=2, epsilon=1e-8,
                 max_tile_rows=None, force_two_pass=False):
    """Pallas implementation of Dice.forward.

    x:     (B, E) if dim == 2, (B, L, E) if dim == 3
    alpha: (E,) (dim==2) or (E, 1) (dim==3)
    gamma, beta: (E,) BatchNorm1d affine parameters
    """
    assert dim in (2, 3)
    if dim == 2:
        assert x.ndim == 2
        x2 = x
        out_shape3 = None
    else:
        assert x.ndim == 3
        B, L, E_ = x.shape
        out_shape3 = (B, L, E_)
        # transpose(1,2) + BN1d over channels == BN over the flat (B*L, E) view.
        x2 = x.reshape(B * L, E_)

    N, E = x2.shape
    dtype = x2.dtype
    itemsize = jnp.dtype(dtype).itemsize

    # ---- lane packing: pack `pack` consecutive rows into one 128-lane row ----
    pack = 128 // E if (E < 128 and 128 % E == 0) else 1
    # TODO(synk): E values that neither divide nor are a multiple of 128 (48,
    #             200, ...) still lower to masked sub-128 stores; repacking them
    #             would require a copy in the wrapper.
    E_lane = E * pack

    n_rows = N
    if N % pack != 0:
        # Small fallback: pad by (< pack) zero rows so the packing reshape stays
        # a free bitcast.  Zero rows contribute nothing to the batch statistics
        # because we always divide by the true N.
        n_rows = _round_up(N, pack)
        x2 = jnp.pad(x2, ((0, n_rows - N), (0, 0)))
    n_packed = n_rows // pack
    xp = x2.reshape(n_packed, E_lane)                         # free reshape

    # ---- generation-aware tile sizing / VMEM budgets ----
    vmem_cap = _vmem_capacity_bytes()
    if vmem_cap <= 64 * _MIB:          # v7x-class: 64 MiB physical VMEM
        tile_bytes, stream_limit = 2 * _MIB, 32 * _MIB
        fused_budget, fused_limit = 16 * _MIB, 52 * _MIB
    else:                              # v5e / v6e: 128 MiB physical VMEM
        tile_bytes, stream_limit = 4 * _MIB, 64 * _MIB
        fused_budget, fused_limit = 40 * _MIB, 96 * _MIB

    sub = {4: 8, 2: 16, 1: 32}.get(itemsize, 8)               # sublane packing
    row_bytes = E_lane * itemsize
    tn_target = max(sub, (tile_bytes // row_bytes) // sub * sub)
    if max_tile_rows is not None:
        tn_target = max(sub, min(tn_target, _round_up(max_tile_rows, sub)))

    if tn_target >= n_packed:
        TN, num_tiles = n_packed, 1                           # single full block
    else:
        TN = tn_target
        num_tiles = _cdiv(n_packed, TN)
        # Prefer an even tile count so the stats sweep splits over 2 TCs (v7x).
        if num_tiles % 2 == 1:
            tn_alt = _round_up(_cdiv(n_packed, num_tiles + 1), sub)
            if tn_alt >= sub and _cdiv(n_packed, tn_alt) % 2 == 0:
                TN, num_tiles = tn_alt, _cdiv(n_packed, tn_alt)

    # Per-feature parameters as f32 vectors.
    gamma1 = jnp.reshape(gamma, (E,)).astype(jnp.float32)
    beta1 = jnp.reshape(beta, (E,)).astype(jnp.float32)
    alpha1 = jnp.reshape(alpha, (E,)).astype(jnp.float32)

    xs_bytes = num_tiles * TN * row_bytes
    use_fused = (not force_two_pass) and xs_bytes <= fused_budget

    if use_fused:
        # ---- single sweep: stash x in VMEM, stats in phase 0, apply in 1 ----
        prm = jnp.tile(jnp.stack([gamma1, beta1, alpha1], axis=0), (1, pack))
        kernel = _make_fused_kernel(TN, E, E_lane, n_packed, N, float(epsilon))
        outp = pl.pallas_call(
            kernel,
            out_shape=jax.ShapeDtypeStruct((n_packed, E_lane), dtype),
            grid=(2, num_tiles),
            in_specs=[
                pl.BlockSpec(
                    (TN, E_lane),
                    lambda ph, i: (i * (1 - ph) + (num_tiles - 1) * ph, 0)),
                pl.BlockSpec((3, E_lane), lambda ph, i: (0, 0)),
            ],
            out_specs=pl.BlockSpec((TN, E_lane), lambda ph, i: (ph * i, 0)),
            scratch_shapes=[
                pltpu.VMEM((num_tiles * TN, E_lane), dtype),   # resident x
                pltpu.VMEM((1, E_lane), jnp.float32),          # sum
                pltpu.VMEM((1, E_lane), jnp.float32),          # sumsq
            ],
            compiler_params=pltpu.CompilerParams(
                dimension_semantics=("arbitrary", "arbitrary"),
                vmem_limit_bytes=fused_limit),
        )(xp, prm)
    else:
        # ---- pass 1: per-core batch statistics (2-way split for megacore) ----
        split = 2 if (num_tiles >= 2 and num_tiles % 2 == 0) else 1
        tiles_per_core = num_tiles // split

        stats_kernel = _make_stats_kernel(TN, tiles_per_core, n_packed)
        sum_p, sumsq_p = pl.pallas_call(
            stats_kernel,
            out_shape=(jax.ShapeDtypeStruct((split * 8, E_lane), jnp.float32),
                       jax.ShapeDtypeStruct((split * 8, E_lane), jnp.float32)),
            grid=(split, tiles_per_core),
            in_specs=[pl.BlockSpec(
                (TN, E_lane), lambda c, i: (c * tiles_per_core + i, 0))],
            out_specs=(pl.BlockSpec((8, E_lane), lambda c, i: (c, 0)),
                       pl.BlockSpec((8, E_lane), lambda c, i: (c, 0))),
            compiler_params=pltpu.CompilerParams(
                dimension_semantics=("parallel", "arbitrary"),
                vmem_limit_bytes=stream_limit),
        )(xp)

        # ---- O(E) glue: fold partials, fold BN affine into scale/shift ----
        inv_n = 1.0 / N
        s = jnp.sum(sum_p.reshape(split * 8 * pack, E), axis=0)
        sq = jnp.sum(sumsq_p.reshape(split * 8 * pack, E), axis=0)
        mean = s * inv_n
        var = jnp.maximum(sq * inv_n - mean * mean, 0.0)       # biased, clamped
        scale = gamma1 * lax.rsqrt(var + epsilon)
        shift = beta1 - mean * scale
        prm = jnp.tile(jnp.stack([scale, shift, alpha1, 1.0 - alpha1], axis=0),
                       (1, pack))                              # (4, E_lane)

        # ---- pass 2: tiled elementwise apply (parallel over tiles / TCs) ----
        outp = pl.pallas_call(
            _apply_kernel,
            out_shape=jax.ShapeDtypeStruct((n_packed, E_lane), dtype),
            grid=(num_tiles,),
            in_specs=[pl.BlockSpec((TN, E_lane), lambda i: (i, 0)),
                      pl.BlockSpec((4, E_lane), lambda i: (0, 0))],
            out_specs=pl.BlockSpec((TN, E_lane), lambda i: (i, 0)),
            compiler_params=pltpu.CompilerParams(
                dimension_semantics=("parallel",),
                vmem_limit_bytes=stream_limit),
        )(xp, prm)

    out2 = outp.reshape(n_rows, E)
    if n_rows != N:
        out2 = out2[:N]
    if dim == 3:
        out2 = out2.reshape(out_shape3)
    return out2


# ----------------------------------------------------------------------------
# Pure-JAX reference (mirrors PyTorch training-mode Dice forward)
# ----------------------------------------------------------------------------
def _dice_ref(x, alpha, gamma, beta, dim, epsilon):
    if dim == 2:
        x2 = x
    else:
        B, L, E_ = x.shape
        x2 = x.reshape(B * L, E_)
    E = x2.shape[-1]
    xf = x2.astype(jnp.float32)
    mean = jnp.mean(xf, axis=0, keepdims=True)
    var = jnp.mean((xf - mean) ** 2, axis=0, keepdims=True)
    y = (xf - mean) * lax.rsqrt(var + epsilon)
    y = y * jnp.reshape(gamma, (1, E)) + jnp.reshape(beta, (1, E))
    p = jax.nn.sigmoid(y)
    a = jnp.reshape(alpha, (1, E))
    out = (a * (1.0 - p) * xf + p * xf).astype(x.dtype)
    if dim == 3:
        out = out.reshape(x.shape)
    return out


if __name__ == "__main__":
    key = jax.random.PRNGKey(0)
    k1, k2, k3, k4, k5, k6, k7 = jax.random.split(key, 7)

    emb = 32
    eps = 1e-8  # the module passes its epsilon (default 1e-8) to BatchNorm1d

    def check(out, ref, tol):
        assert out.shape == ref.shape and out.dtype == ref.dtype
        ok = jnp.allclose(out.astype(jnp.float32), ref.astype(jnp.float32),
                          rtol=tol, atol=tol)
        assert bool(ok), float(jnp.max(jnp.abs(
            out.astype(jnp.float32) - ref.astype(jnp.float32))))

    # 1) dim == 2, parameters at PyTorch init (gamma=1, beta=0, alpha=0): fused path
    gamma0 = jnp.ones((emb,), jnp.float32)
    beta0 = jnp.zeros((emb,), jnp.float32)
    alpha0 = jnp.zeros((emb,), jnp.float32)
    x2 = jax.random.normal(k1, (8, emb), jnp.float32)
    out2 = dice_forward(x2, alpha0, gamma0, beta0, dim=2, epsilon=eps)
    jax.block_until_ready(out2)
    check(out2, _dice_ref(x2, alpha0, gamma0, beta0, 2, eps), 1e-4)

    # 2) dim == 3 with trained-like parameters: fused path
    x3 = jax.random.normal(k2, (2, 8, emb), jnp.float32)
    gamma_r = 1.0 + 0.1 * jax.random.normal(k3, (emb,), jnp.float32)
    beta_r = 0.1 * jax.random.normal(k4, (emb,), jnp.float32)
    alpha_r = 0.5 * jax.random.normal(k5, (emb, 1), jnp.float32)
    out3 = dice_forward(x3, alpha_r, gamma_r, beta_r, dim=3, epsilon=eps)
    jax.block_until_ready(out3)
    check(out3, _dice_ref(x3, alpha_r, gamma_r, beta_r, 3, eps), 1e-4)

    # 3) ragged tail + multi-tile + N % pack != 0, fused path (forced small tiles)
    xrag = jax.random.normal(k6, (50, emb), jnp.float32)
    a_vec = alpha_r.reshape(emb)
    outf = dice_forward(xrag, a_vec, gamma_r, beta_r, dim=2, epsilon=eps,
                        max_tile_rows=8)
    jax.block_until_ready(outf)
    check(outf, _dice_ref(xrag, a_vec, gamma_r, beta_r, 2, eps), 1e-4)

    # 4) same input, streaming two-pass path (2-way stats split + masked tail)
    outs = dice_forward(xrag, a_vec, gamma_r, beta_r, dim=2, epsilon=eps,
                        max_tile_rows=8, force_two_pass=True)
    jax.block_until_ready(outs)
    check(outs, _dice_ref(xrag, a_vec, gamma_r, beta_r, 2, eps), 1e-4)

    # 5) bf16 I/O (16-row sublane packing), fused path
    xb = jax.random.normal(k7, (16, emb), jnp.float32).astype(jnp.bfloat16)
    outb = dice_forward(xb, a_vec, gamma_r, beta_r, dim=2, epsilon=eps)
    jax.block_until_ready(outb)
    check(outb, _dice_ref(xb, a_vec, gamma_r, beta_r, 2, eps), 3e-2)

    print("KERNEL_OK")
</pallas_src>

<mosaic_0001>
module attributes {stable_mosaic.version = 11 : i64} {
  func.func @kernel(%arg0: i32, %arg1: i32, %arg2: memref<2x128xf32, #tpu.memory_space<vmem>>, %arg3: memref<3x128xf32, #tpu.memory_space<vmem>>, %arg4: memref<2x128xf32, #tpu.memory_space<vmem>>, %arg5: memref<2x128xf32, #tpu.memory_space<vmem>>, %arg6: memref<1x128xf32, #tpu.memory_space<vmem>>, %arg7: memref<1x128xf32, #tpu.memory_space<vmem>>) attributes {dimension_semantics = [#tpu.dimension_semantics<arbitrary>, #tpu.dimension_semantics<arbitrary>], iteration_bounds = array<i64: 2, 1>, scalar_prefetch = 0 : i64, scratch_operands = 3 : i64, tpu.core_type = #tpu.core_type<tc>, window_params = [{transform_indices = @transform_0, window_bounds = array<i64: 2, 128>}, {pipeline_mode = #tpu.pipeline_mode<synchronous>, transform_indices = @transform_1, window_bounds = array<i64: 3, 128>}, {transform_indices = @transform_2, window_bounds = array<i64: 2, 128>}]} {
    %c0_i32 = arith.constant 0 : i32
    %0 = arith.cmpi eq, %arg0, %c0_i32 : i32
    %c0_i32_0 = arith.constant 0 : i32
    %1 = arith.cmpi eq, %arg1, %c0_i32_0 : i32
    %2 = arith.andi %0, %1 : i1
    %3 = arith.extui %2 : i1 to i32
    %c0_i32_1 = arith.constant 0 : i32
    %4 = arith.cmpi ne, %3, %c0_i32_1 : i32
    scf.if %4 {
      %cst = arith.constant 0.000000e+00 : f32
      %11 = vector.broadcast %cst : f32 to vector<1x128xf32>
      %c0 = arith.constant 0 : index
      %c0_5 = arith.constant 0 : index
      %12 = vector.load %arg6[%c0, %c0_5] : memref<1x128xf32, #tpu.memory_space<vmem>>, vector<1x128xf32>
      tpu.vector_store %arg6[%c0, %c0_5], %11 {strides = array<i32>} : memref<1x128xf32, #tpu.memory_space<vmem>>, vector<1x128xf32>,
      %cst_6 = arith.constant 0.000000e+00 : f32
      %13 = vector.broadcast %cst_6 : f32 to vector<1x128xf32>
      %c0_7 = arith.constant 0 : index
      %c0_8 = arith.constant 0 : index
      %14 = vector.load %arg7[%c0_7, %c0_8] : memref<1x128xf32, #tpu.memory_space<vmem>>, vector<1x128xf32>
      tpu.vector_store %arg7[%c0_7, %c0_8], %13 {strides = array<i32>} : memref<1x128xf32, #tpu.memory_space<vmem>>, vector<1x128xf32>,
    } else {
    }
    %c0_i32_2 = arith.constant 0 : i32
    %5 = arith.cmpi eq, %arg0, %c0_i32_2 : i32
    %6 = arith.extui %5 : i1 to i32
    %c0_i32_3 = arith.constant 0 : i32
    %7 = arith.cmpi ne, %6, %c0_i32_3 : i32
    scf.if %7 {
      %c2_i32 = arith.constant 2 : i32
      %11 = arith.muli %arg1, %c2_i32 : i32
      %12 = tpu.assume_multiple %11, 2 : i32
      %c0 = arith.constant 0 : index
      %c0_5 = arith.constant 0 : index
      %13 = vector.load %arg2[%c0, %c0_5] : memref<2x128xf32, #tpu.memory_space<vmem>>, vector<2x128xf32>
      %14 = arith.index_cast %12 : i32 to index
      %c0_6 = arith.constant 0 : index
      %15 = vector.load %arg5[%14, %c0_6] : memref<2x128xf32, #tpu.memory_space<vmem>>, vector<2x128xf32>
      tpu.vector_store %arg5[%14, %c0_6], %13 {strides = array<i32>} : memref<2x128xf32, #tpu.memory_space<vmem>>, vector<2x128xf32>,
      %c0_7 = arith.constant 0 : index
      %c0_8 = arith.constant 0 : index
      %16 = vector.load %arg2[%c0_7, %c0_8] : memref<2x128xf32, #tpu.memory_space<vmem>>, vector<2x128xf32>
      %c0_9 = arith.constant 0 : index
      %c0_10 = arith.constant 0 : index
      %17 = vector.load %arg6[%c0_9, %c0_10] : memref<1x128xf32, #tpu.memory_space<vmem>>, vector<1x128xf32>
      %cst = arith.constant dense<0.000000e+00> : vector<128xf32>
      %18 = vector.multi_reduction <add>, %16, %cst [0] : vector<2x128xf32> to vector<128xf32>
      %19 = vector.shape_cast %18 : vector<128xf32> to vector<1x128xf32>
      %20 = arith.addf %17, %19 : vector<1x128xf32>
      %c0_11 = arith.constant 0 : index
      %c0_12 = arith.constant 0 : index
      %21 = vector.load %arg6[%c0_11, %c0_12] : memref<1x128xf32, #tpu.memory_space<vmem>>, vector<1x128xf32>
      tpu.vector_store %arg6[%c0_11, %c0_12], %20 {strides = array<i32>} : memref<1x128xf32, #tpu.memory_space<vmem>>, vector<1x128xf32>,
      %c0_13 = arith.constant 0 : index
      %c0_14 = arith.constant 0 : index
      %22 = vector.load %arg7[%c0_13, %c0_14] : memref<1x128xf32, #tpu.memory_space<vmem>>, vector<1x128xf32>
      %23 = arith.mulf %16, %16 : vector<2x128xf32>
      %cst_15 = arith.constant dense<0.000000e+00> : vector<128xf32>
      %24 = vector.multi_reduction <add>, %23, %cst_15 [0] : vector<2x128xf32> to vector<128xf32>
      %25 = vector.shape_cast %24 : vector<128xf32> to vector<1x128xf32>
      %26 = arith.addf %22, %25 : vector<1x128xf32>
      %c0_16 = arith.constant 0 : index
      %c0_17 = arith.constant 0 : index
      %27 = vector.load %arg7[%c0_16, %c0_17] : memref<1x128xf32, #tpu.memory_space<vmem>>, vector<1x128xf32>
      tpu.vector_store %arg7[%c0_16, %c0_17], %26 {strides = array<i32>} : memref<1x128xf32, #tpu.memory_space<vmem>>, vector<1x128xf32>,
    } else {
    }
    %c1_i32 = arith.constant 1 : i32
    %8 = arith.cmpi eq, %arg0, %c1_i32 : i32
    %9 = arith.extui %8 : i1 to i32
    %c0_i32_4 = arith.constant 0 : i32
    %10 = arith.cmpi ne, %9, %c0_i32_4 : i32
    scf.if %10 {
      %c0 = arith.constant 0 : index
      %c0_5 = arith.constant 0 : index
      %11 = vector.load %arg6[%c0, %c0_5] : memref<1x128xf32, #tpu.memory_space<vmem>>, vector<1x128xf32>
      %c0_6 = arith.constant 0 : index
      %c0_7 = arith.constant 0 : index
      %12 = vector.load %arg7[%c0_6, %c0_7] : memref<1x128xf32, #tpu.memory_space<vmem>>, vector<1x128xf32>
      %c32_i32 = arith.constant 32 : i32
      %13 = tpu.dynamic_rotate %11 by %c32_i32 dim 1 : vector<1x128xf32>, i32 -> vector<1x128xf32>
      %14 = arith.addf %11, %13 : vector<1x128xf32>
      %c32_i32_8 = arith.constant 32 : i32
      %15 = tpu.dynamic_rotate %12 by %c32_i32_8 dim 1 : vector<1x128xf32>, i32 -> vector<1x128xf32>
      %16 = arith.addf %12, %15 : vector<1x128xf32>
      %c64_i32 = arith.constant 64 : i32
      %17 = tpu.dynamic_rotate %14 by %c64_i32 dim 1 : vector<1x128xf32>, i32 -> vector<1x128xf32>
      %18 = arith.addf %14, %17 : vector<1x128xf32>
      %c64_i32_9 = arith.constant 64 : i32
      %19 = tpu.dynamic_rotate %16 by %c64_i32_9 dim 1 : vector<1x128xf32>, i32 -> vector<1x128xf32>
      %20 = arith.addf %16, %19 : vector<1x128xf32>
      %cst = arith.constant 1.250000e-01 : f32
      %21 = vector.broadcast %cst : f32 to vector<1x128xf32>
      %22 = arith.mulf %18, %21 : vector<1x128xf32>
      %cst_10 = arith.constant 1.250000e-01 : f32
      %23 = vector.broadcast %cst_10 : f32 to vector<1x128xf32>
      %24 = arith.mulf %20, %23 : vector<1x128xf32>
      %25 = arith.mulf %22, %22 : vector<1x128xf32>
      %26 = arith.subf %24, %25 : vector<1x128xf32>
      %cst_11 = arith.constant 0.000000e+00 : f32
      %27 = vector.broadcast %cst_11 : f32 to vector<1x128xf32>
      %28 = arith.maximumf %26, %27 : vector<1x128xf32>
      %c0_12 = arith.constant 0 : index
      %c0_13 = arith.constant 0 : index
      %29 = vector.load %arg3[%c0_12, %c0_13] : memref<3x128xf32, #tpu.memory_space<vmem>>, vector<1x128xf32>
      %c1 = arith.constant 1 : index
      %c0_14 = arith.constant 0 : index
      %30 = vector.load %arg3[%c1, %c0_14] : memref<3x128xf32, #tpu.memory_space<vmem>>, vector<1x128xf32>
      %c2 = arith.constant 2 : index
      %c0_15 = arith.constant 0 : index
      %31 = vector.load %arg3[%c2, %c0_15] : memref<3x128xf32, #tpu.memory_space<vmem>>, vector<1x128xf32>
      %cst_16 = arith.constant 9.99999993E-9 : f32
      %32 = vector.broadcast %cst_16 : f32 to vector<1x128xf32>
      %33 = arith.addf %28, %32 : vector<1x128xf32>
      %34 = math.rsqrt %33 : vector<1x128xf32>
      %35 = arith.mulf %29, %34 : vector<1x128xf32>
      %36 = arith.mulf %22, %35 : vector<1x128xf32>
      %37 = arith.subf %30, %36 : vector<1x128xf32>
      %c2_i32 = arith.constant 2 : i32
      %38 = arith.muli %arg1, %c2_i32 : i32
      %39 = tpu.assume_multiple %38, 2 : i32
      %40 = arith.index_cast %39 : i32 to index
      %c0_17 = arith.constant 0 : index
      %41 = vector.load %arg5[%40, %c0_17] : memref<2x128xf32, #tpu.memory_space<vmem>>, vector<2x128xf32>
      %42 = vector.broadcast %35 : vector<1x128xf32> to vector<2x128xf32>
      %43 = arith.mulf %41, %42 : vector<2x128xf32>
      %44 = vector.broadcast %37 : vector<1x128xf32> to vector<2x128xf32>
      %45 = arith.addf %43, %44 : vector<2x128xf32>
      %46 = arith.negf %45 : vector<2x128xf32>
      %47 = math.exp %46 : vector<2x128xf32>
      %cst_18 = arith.constant 1.000000e+00 : f32
      %48 = vector.broadcast %cst_18 : f32 to vector<2x128xf32>
      %49 = arith.addf %48, %47 : vector<2x128xf32>
      %50 = arith.divf %48, %49 : vector<2x128xf32>
      %cst_19 = arith.constant 1.000000e+00 : f32
      %51 = vector.broadcast %cst_19 : f32 to vector<1x128xf32>
      %52 = arith.subf %51, %31 : vector<1x128xf32>
      %53 = vector.broadcast %52 : vector<1x128xf32> to vector<2x128xf32>
      %54 = arith.mulf %50, %53 : vector<2x128xf32>
      %55 = vector.broadcast %31 : vector<1x128xf32> to vector<2x128xf32>
      %56 = arith.addf %55, %54 : vector<2x128xf32>
      %57 = arith.mulf %41, %56 : vector<2x128xf32>
      %c0_20 = arith.constant 0 : index
      %c0_21 = arith.constant 0 : index
      %58 = vector.load %arg4[%c0_20, %c0_21] : memref<2x128xf32, #tpu.memory_space<vmem>>, vector<2x128xf32>
      tpu.vector_store %arg4[%c0_20, %c0_21], %57 {strides = array<i32>} : memref<2x128xf32, #tpu.memory_space<vmem>>, vector<2x128xf32>,
    } else {
    }
    return
  }
  func.func @transform_0(%arg0: i32, %arg1: i32) -> (i32, i32) {
    %c1_i32 = arith.constant 1 : i32
    %0 = arith.subi %c1_i32, %arg0 : i32
    %1 = arith.muli %arg1, %0 : i32
    %c0_i32 = arith.constant 0 : i32
    %2 = arith.muli %c0_i32, %arg0 : i32
    %3 = arith.addi %1, %2 : i32
    %c0_i32_0 = arith.constant 0 : i32
    %c0_i32_1 = arith.constant 0 : i32
    return %3, %c0_i32_0 : i32, i32
  }
  func.func @transform_1(%arg0: i32, %arg1: i32) -> (i32, i32) {
    %c0_i32 = arith.constant 0 : i32
    %c0_i32_0 = arith.constant 0 : i32
    %c0_i32_1 = arith.constant 0 : i32
    return %c0_i32, %c0_i32_0 : i32, i32
  }
  func.func @transform_2(%arg0: i32, %arg1: i32) -> (i32, i32) {
    %0 = arith.muli %arg0, %arg1 : i32
    %c0_i32 = arith.constant 0 : i32
    %c0_i32_0 = arith.constant 0 : i32
    return %0, %c0_i32 : i32, i32
  }
}

</mosaic_0001>

<llo_original>
// kernel: tpu_custom_call.1
$region0: #{tpu_custom_call.1}
  #allocation0 [shape = 'u32[]', space=smem, size = 0x4, offset = 0x4, fixed_abs, tag = 'smem constant byte address 0x4 - core index']
  #allocation1 [shape = 'u32[144,128]{1,0:T(1,128)}', space=vmem, size = 0x12000, scoped, tag = 'internal scratch']
  #allocation2 [shape = 'f32[2,128]{1,0:T(2,128)}', space=vmem, size = 0x400, scoped, tag = 'scratch operand']
  #allocation3 [shape = 'f32[1,128]{1,0:T(1,128)}', space=vmem, size = 0x200, scoped, tag = 'scratch operand']
  #allocation4 [shape = 'f32[1,128]{1,0:T(1,128)}', space=vmem, size = 0x200, scoped, tag = 'scratch operand']
  %s0 = inlined_call_operand.hbm [shape: f32[2,128], index: 0, kind: input, shape index: {}]
  %s1 = inlined_call_operand.hbm [shape: f32[3,128], index: 1, kind: input, shape index: {}]
  %s2 = inlined_call_operand.hbm [shape: f32[2,128], index: 2, kind: output, shape index: {}]
  %s3 = sld [smem:[#allocation0]]
  $region61: #{tpu_custom_call.1} parent=0
    _
  %s5 = ssub.s32 1, %s3
  %s6 = scalar_select 0, %s5, %s3
  $region1: #{tpu_custom_call.1} parent=0
    #allocation5 [shape = 'u8[2048]{0}', space=vmem, size = 0x800, scoped, tag = 'input window, operand 0']
    #allocation6 [shape = 's32[2]{0}', space=sflag, size = 0x8, scoped, tag = 'scoped memory for tpu_custom_call.1']
    #allocation7 [shape = 's32[2]{0}', space=sflag, size = 0x8, scoped, tag = 'scoped memory for tpu_custom_call.1']
    #allocation8 [shape = 'u8[2048]{0}', space=vmem, size = 0x800, scoped, tag = 'input window, operand 1, single buffered']
    #allocation9 [shape = 's32[1]{0}', space=sflag, size = 0x4, scoped, tag = 'scoped memory for tpu_custom_call.1']
    #allocation10 [shape = 'u8[2048]{0}', space=vmem, size = 0x800, scoped, tag = 'output window, operand 0']
    %7 = vsyncpa [#allocation6], 0
    %s8 = scalar_lea.sflag [#allocation6], 1
    %9 = vsyncpa %s8, 0
    %10 = vsyncpa [#allocation9], 0
    %11 = vsyncpa [#allocation7], 0
    %s12 = scalar_lea.sflag [#allocation7], 1
    %13 = vsyncpa %s12, 0
    loop: start=0, step=1, limit=4
    $region2: #{tpu_custom_call.1} parent=1 // loop_pre_header
      _
    $region3: #{tpu_custom_call.1} parent=1 // loop_header
      %s15 = sphi 0, %s19
      %p16 = scmp.ge.s32.totalorder %s15, 4
      %s22 = sphi 0, %s34
      %s23 = sphi 0, %s30
      %s24 = sphi 0, %s22
      %s25 = sphi 0, %s23
      %s26 = sphi 0, %s24
      %s27 = sphi 0, %s25
      %s41 = sphi 0, %s43
      %s44 = sphi 0, %s41
      %s45 = sphi 0, %s44
      %s61 = sphi 0, %s45
      %s65 = sphi 0, %s65
      %s67 = sphi 0, %s65
      %s68 = sphi 0, %s67
      %s82 = sphi 0, %s68
      %s90 = sphi 0, %s92
      %s93 = sphi 0, %s90
      %s94 = sphi 0, %s93
      %s110 = sphi 0, %s94
    $region4: #{tpu_custom_call.1} parent=1 // loop_header_branch
      %18 = sbr.rel (%p16) target = $region8
    $region5: #{tpu_custom_call.1} parent=1 // loop_body
      %s20 = ssub.s32 %s15, 1
      %s21 = ssub.s32 %s15, 2
      %s28 = sadd.s32 1, %s23
      %p29 = scmp.ge.s32.totalorder %s28, 1
      %s30 = scalar_select %p29, 0, %s28
      %s31 = sadd.s32 1, %s22
      %s32 = scalar_select %p29, %s31, %s22
      %p33 = scmp.ge.s32.totalorder %s32, 2
      %s34 = scalar_select %p33, 0, %s32
      %s35 = ssub.s32 1, %s22
      %s36 = smul.u32 %s23, %s35
      %s37 = ssub.s32 1, %s34
      %s38 = smul.u32 %s30, %s37
      %s39 = ssub.s32 %s36, %s38
      %p40 = scmp.eq.s32.totalorder %s39, 0
      %s42 = sadd.s32 %s41, 1
      %s43 = scalar_select %p40, %s41, %s42
      %p46 = pneg %p40
      %p47 = scmp.eq.s32.totalorder %s15, 1
      %p48 = por %p46, %p47
      %p49 = scmp.ne.s32.totalorder %s41, %s44
      %p50 = scmp.eq.s32.totalorder %s15, 0
      %p51 = por %p49, %p50
      %p52 = scmp.ne.s32.totalorder %s41, %s44
      %p53 = scmp.eq.s32.totalorder %s20, 1
      %p54 = por %p52, %p53
      %p55 = scmp.ne.s32.totalorder %s44, %s45
      %p56 = scmp.eq.s32.totalorder %s20, 0
      %p57 = por %p55, %p56
      %p58 = scmp.ne.s32.totalorder %s44, %s45
      %p59 = scmp.eq.s32.totalorder %s21, 1
      %p60 = por %p58, %p59
      %p62 = scmp.ne.s32.totalorder %s45, %s61
      %p63 = scmp.eq.s32.totalorder %s21, 0
      %p64 = por %p62, %p63
      %s66 = sadd.s32 %s65, 1
      %p69 = scmp.eq.s32.totalorder %s15, 1
      %p70 = scmp.ne.s32.totalorder %s65, %s67
      %p71 = scmp.eq.s32.totalorder %s15, 0
      %p72 = por %p70, %p71
      %p73 = scmp.ne.s32.totalorder %s65, %s67
      %p74 = scmp.eq.s32.totalorder %s20, 1
      %p75 = por %p73, %p74
      %p76 = scmp.ne.s32.totalorder %s67, %s68
      %p77 = scmp.eq.s32.totalorder %s20, 0
      %p78 = por %p76, %p77
      %p79 = scmp.ne.s32.totalorder %s67, %s68
      %p80 = scmp.eq.s32.totalorder %s21, 1
      %p81 = por %p79, %p80
      %p83 = scmp.ne.s32.totalorder %s68, %s82
      %p84 = scmp.eq.s32.totalorder %s21, 0
      %p85 = por %p83, %p84
      %s86 = smul.u32 %s22, %s23
      %s87 = smul.u32 %s34, %s30
      %s88 = ssub.s32 %s86, %s87
      %p89 = scmp.eq.s32.totalorder %s88, 0
      %s91 = sadd.s32 %s90, 1
      %s92 = scalar_select %p89, %s90, %s91
      %p95 = pneg %p89
      %p96 = scmp.eq.s32.totalorder %s15, 1
      %p97 = por %p95, %p96
      %p98 = scmp.ne.s32.totalorder %s90, %s93
      %p99 = scmp.eq.s32.totalorder %s15, 0
      %p100 = por %p98, %p99
      %p101 = scmp.ne.s32.totalorder %s90, %s93
      %p102 = scmp.eq.s32.totalorder %s20, 1
      %p103 = por %p101, %p102
      %p104 = scmp.ne.s32.totalorder %s93, %s94
      %p105 = scmp.eq.s32.totalorder %s20, 0
      %p106 = por %p104, %p105
      %p107 = scmp.ne.s32.totalorder %s93, %s94
      %p108 = scmp.eq.s32.totalorder %s21, 1
      %p109 = por %p107, %p108
      %p111 = scmp.ne.s32.totalorder %s94, %s110
      %p112 = scmp.eq.s32.totalorder %s21, 0
      %p113 = por %p111, %p112
      %p114 = scmp.le.s32.totalorder 1, %s15
      %p115 = scmp.lt.s32.totalorder %s15, 3
      %p116 = pnand %p114, %p115
      %p117 = pneg %p116
      // Predicated region
      $region9: #{tpu_custom_call.1} parent=5 // pred_check
        _
      $region10: #{tpu_custom_call.1} parent=5 // pred_check_branch
        %119 = sbr.rel (%p116) target = $region12
      $region11: #{tpu_custom_call.1} parent=5 // pred_region
        %s120 = ssub.s32 %s15, 1
        // Predicated region
        $region13: #{tpu_custom_call.1} parent=11 // pred_check
          %p121 = pneg %p78
        $region14: #{tpu_custom_call.1} parent=11 // pred_check_branch
          %123 = sbr.rel (%p121) target = $region16
        $region15: #{tpu_custom_call.1} parent=11 // pred_region
          %s125 = ssub.s32 64, 64
          %126 = vsyncadd [#allocation9], %s125
          %s128 = sshll.u32 [#allocation8], 4
          %s129 = int_to_ptr.vmem [resolvable:$true] %s128
          %131 = dma.hbm_to_vmem [thread:$0]  %s1, 64, %s129, [#allocation9]
        $region16: #{tpu_custom_call.1} parent=11 // pred_fallthru
          _
      $region12: #{tpu_custom_call.1} parent=5 // pred_fallthru
        _
      %p132 = scmp.lt.s32.totalorder %s15, 2
      // Predicated region
      $region17: #{tpu_custom_call.1} parent=5 // pred_check
        %p133 = pneg %p132
      $region18: #{tpu_custom_call.1} parent=5 // pred_check_branch
        %135 = sbr.rel (%p133) target = $region20
      $region19: #{tpu_custom_call.1} parent=5 // pred_region
        // Predicated region
        $region21: #{tpu_custom_call.1} parent=19 // pred_check
          %p136 = pneg %p51
        $region22: #{tpu_custom_call.1} parent=19 // pred_check_branch
          %138 = sbr.rel (%p136) target = $region24
        $region23: #{tpu_custom_call.1} parent=19 // pred_region
          %s139 = sand.u32 %s41, 1
          %s140 = scalar_lea.sflag [#allocation6], %s139
          %s141 = sand.u32 %s41, 1
          %s142 = smul.addr %s141, 2
          %s143 = scalar_lea.vmem [#allocation5], %s142
          %s144 = ssub.s32 1, %s22
          %s145 = smul.u32 %s23, %s144
          %s147 = ssub.s32 32, 32
          %148 = vsyncadd %s140, %s147
          %s149 = smul.addr %s145, 32
          %s150 = scalar_lea.hbm %s0, %s149
          %s152 = sshll.u32 %s143, 4
          %s153 = int_to_ptr.vmem [resolvable:$true] %s152
          %155 = dma.hbm_to_vmem [thread:$0]  %s150, 32, %s153, %s140
        $region24: #{tpu_custom_call.1} parent=19 // pred_fallthru
          _
      $region20: #{tpu_custom_call.1} parent=5 // pred_fallthru
        _
      %p156 = scmp.le.s32.totalorder 1, %s15
      %p157 = scmp.lt.s32.totalorder %s15, 3
      %p158 = pnand %p156, %p157
      %p159 = pneg %p158
      // Predicated region
      $region25: #{tpu_custom_call.1} parent=5 // pred_check
        _
      $region26: #{tpu_custom_call.1} parent=5 // pred_check_branch
        %161 = sbr.rel (%p158) target = $region28
      $region27: #{tpu_custom_call.1} parent=5 // pred_region
        %s162 = ssub.s32 %s15, 1
        %s163 = sand.u32 %s44, 1
        %s164 = scalar_lea.sflag [#allocation6], %s163
        %s165 = sand.u32 %s44, 1
        %s166 = smul.addr %s165, 2
        %s167 = scalar_lea.vmem [#allocation5], %s166
        // Predicated region
        $region29: #{tpu_custom_call.1} parent=27 // pred_check
          %p168 = pneg %p57
        $region30: #{tpu_custom_call.1} parent=27 // pred_check_branch
          %170 = sbr.rel (%p168) target = $region32
        $region31: #{tpu_custom_call.1} parent=27 // pred_region
          %171 = dma.done %s164, 32
        $region32: #{tpu_custom_call.1} parent=27 // pred_fallthru
          _
        // Predicated region
        $region33: #{tpu_custom_call.1} parent=27 // pred_check
          %p172 = pneg %p78
        $region34: #{tpu_custom_call.1} parent=27 // pred_check_branch
          %174 = sbr.rel (%p172) target = $region36
        $region35: #{tpu_custom_call.1} parent=27 // pred_region
          %175 = dma.done [#allocation9], 64
        $region36: #{tpu_custom_call.1} parent=27 // pred_fallthru
          _
        %s176 = sand.u32 %s44, 1
        %s177 = scalar_lea.sflag [#allocation6], %s176
        %s178 = sand.u32 %s44, 1
        %s179 = smul.addr %s178, 2
        %s180 = scalar_lea.vmem [#allocation5], %s179
        %p181 = pneg %p57
        %p182 = pneg %p54
        %p183 = pneg %p78
        %p184 = pneg %p75
        %p185 = pneg %p106
        %p186 = pneg %p103
        %s187 = sand.u32 %s93, 1
        %s188 = scalar_lea.sflag [#allocation7], %s187
        %s189 = sand.u32 %s93, 1
        %s190 = smul.addr %s189, 2
        %s191 = scalar_lea.vmem [#allocation10], %s190
        %s192 = ssub.s32 1, %s24
        %s193 = smul.u32 %s25, %s192
        %s194 = smul.u32 %s24, %s25
        %p195 = scmp.eq.s32.totalorder %s24, 0
        %p196 = scmp.eq.s32.totalorder %s25, 0
        %p197 = pnand %p195, %p196
        %p198 = pneg %p197
        // Predicated region
        $region37: #{tpu_custom_call.1} parent=27 // pred_check
          _
        $region38: #{tpu_custom_call.1} parent=27 // pred_check_branch
          %200 = sbr.rel (%p197) target = $region40
        $region39: #{tpu_custom_call.1} parent=27 // pred_region
          %201 = vst [vmem:[#allocation3] sm:$0x1] 0.0
          %202 = vst [vmem:[#allocation4] sm:$0x1] 0.0
        $region40: #{tpu_custom_call.1} parent=27 // pred_fallthru
          _
        // Predicated region
        $region41: #{tpu_custom_call.1} parent=27 // pred_check
          %p203 = pneg %p195
        $region42: #{tpu_custom_call.1} parent=27 // pred_check_branch
          %205 = sbr.rel (%p203) target = $region44
        $region43: #{tpu_custom_call.1} parent=27 // pred_region
          %s206 = smul.u32 %s25, 2
          %v207 = vld [vmem:[%s167] sm:$0x3]
          %s208 = scalar_lea.vmem [#allocation2], %s206
          %209 = vst [vmem:[%s208] sm:$0x3] %v207
          %v210 = vld [vmem:[%s167] sm:$0x3]
          %v211 = vld [vmem:[#allocation3] sm:$0x1]
          %vm212 = vcmask 1041408
          %v213 = vsel %vm212, %v210, 0.0
          %v214 = vrot.slane %v213, 4
          %v215 = vadd.f32 %v213, %v214
          %v216 = vrot.slane %v215, 2
          %v217 = vadd.f32 %v215, %v216
          %v218 = vrot.slane %v217, 1
          %v219 = vadd.f32 %v217, %v218
          %v220 = vadd.f32 %v211, %v219
          %221 = vst [vmem:[#allocation3] sm:$0x1] %v220
          %v222 = vld [vmem:[#allocation4] sm:$0x1]
          %v223 = vmul.f32 %v210, %v210
          %v224 = vsel %vm212, %v223, 0.0
          %v225 = vrot.slane %v224, 4
          %v226 = vadd.f32 %v224, %v225
          %v227 = vrot.slane %v226, 2
          %v228 = vadd.f32 %v226, %v227
          %v229 = vrot.slane %v228, 1
          %v230 = vadd.f32 %v228, %v229
          %v231 = vadd.f32 %v222, %v230
          %232 = vst [vmem:[#allocation4] sm:$0x1] %v231
        $region44: #{tpu_custom_call.1} parent=27 // pred_fallthru
          _
        %p233 = scmp.eq.s32.totalorder %s24, 1
        // Predicated region
        $region45: #{tpu_custom_call.1} parent=27 // pred_check
          %p234 = pneg %p233
        $region46: #{tpu_custom_call.1} parent=27 // pred_check_branch
          %236 = sbr.rel (%p234) target = $region48
        $region47: #{tpu_custom_call.1} parent=27 // pred_region
          %v237 = vld [vmem:[#allocation3] sm:$0x1]
          %v238 = vld [vmem:[#allocation4] sm:$0x1]
          %239 = vrot.lane.b32.xlu0 %v237, 32
          %v240 = vpop.permute.xlu0 %239
          %v241 = vadd.f32 %v237, %v240
          %242 = vrot.lane.b32.xlu0 %v238, 32
          %v243 = vpop.permute.xlu0 %242
          %v244 = vadd.f32 %v238, %v243
          %245 = vrot.lane.b32.xlu0 %v241, 64
          %v246 = vpop.permute.xlu0 %245
          %v247 = vadd.f32 %v241, %v246
          %248 = vrot.lane.b32.xlu0 %v244, 64
          %v249 = vpop.permute.xlu0 %248
          %v250 = vadd.f32 %v244, %v249
          %v251 = vmul.f32 %v247, 0.125
          %v252 = vmul.f32 %v250, 0.125
          %v253 = vmul.f32 %v251, %v251
          %v254 = vsub.f32 %v252, %v253
          %v255 = vmax.f32 %v254, 0.0
          %v256 = vld [vmem:[#allocation8] sm:$0x1]
          %v257 = vld [vmem:[#allocation8 + $0x1] sm:$0x1]
          %v258 = vld [vmem:[#allocation8 + $0x2] sm:$0x1]
          %v259 = vadd.f32 %v255, 1e-08
          %v260 = vrsqrt.pop %v259
          %v261 = vmul.f32 %v256, %v260
          %v262 = vmul.f32 %v251, %v261
          %v263 = vsub.f32 %v257, %v262
          %s264 = smul.u32 %s25, 2
          %s265 = scalar_lea.vmem [#allocation2], %s264
          %v266 = vld [vmem:[%s265] sm:$0x3]
          %v267 = vlaneseq
          %v268 = vshrl.u32 %v267, 7
          %v269 = vsub.s32 0, %v268
          %v270 = vrot.slane %v261, %v269
          %v271 = vmul.f32 %v266, %v270
          %v272 = vlaneseq
          %v273 = vshrl.u32 %v272, 7
          %v274 = vsub.s32 0, %v273
          %v275 = vrot.slane %v263, %v274
          %v276 = vadd.f32 %v271, %v275
          %v277 = vxor.u32 %v276, 2147483648
          %v278 = vmul.f32 %v277, 1.442695
          %v279 = vpow.pop %v278
          %v280 = vadd.f32 %v279, 1.0
          %v281 = vrcp.pop %v280
          %v282 = vmul.f32 1.0, %v281
          %v283 = vsub.f32 1.0, %v258
          %v284 = vlaneseq
          %v285 = vshrl.u32 %v284, 7
          %v286 = vsub.s32 0, %v285
          %v287 = vrot.slane %v283, %v286
          %v288 = vmul.f32 %v282, %v287
          %v289 = vlaneseq
          %v290 = vshrl.u32 %v289, 7
          %v291 = vsub.s32 0, %v290
          %v292 = vrot.slane %v258, %v291
          %v293 = vadd.f32 %v292, %v288
          %v294 = vmul.f32 %v266, %v293
          %295 = vst [vmem:[%s191] sm:$0x3] %v294
        $region48: #{tpu_custom_call.1} parent=27 // pred_fallthru
          _
        %s296 = sand.u32 %s93, 1
        %s297 = scalar_lea.sflag [#allocation7], %s296
        %s298 = sand.u32 %s93, 1
        %s299 = smul.addr %s298, 2
        %s300 = scalar_lea.vmem [#allocation10], %s299
        // Predicated region
        $region49: #{tpu_custom_call.1} parent=27 // pred_check
          %p301 = pneg %p103
        $region50: #{tpu_custom_call.1} parent=27 // pred_check_branch
          %303 = sbr.rel (%p301) target = $region52
        $region51: #{tpu_custom_call.1} parent=27 // pred_region
          %s304 = smul.u32 %s24, %s25
          %s306 = ssub.s32 32, 32
          %307 = vsyncadd %s297, %s306
          %s308 = smul.addr %s304, 32
          %s309 = scalar_lea.hbm %s2, %s308
          %s311 = sshll.u32 %s300, 4
          %s312 = int_to_ptr.vmem [resolvable:$true] %s311
          %314 = dma.vmem_to_hbm [thread:$0]  %s312, 32, %s309, %s297
        $region52: #{tpu_custom_call.1} parent=27 // pred_fallthru
          _
      $region28: #{tpu_custom_call.1} parent=5 // pred_fallthru
        _
      %p315 = scmp.le.s32.totalorder 2, %s15
      // Predicated region
      $region53: #{tpu_custom_call.1} parent=5 // pred_check
        %p316 = pneg %p315
      $region54: #{tpu_custom_call.1} parent=5 // pred_check_branch
        %318 = sbr.rel (%p316) target = $region56
      $region55: #{tpu_custom_call.1} parent=5 // pred_region
        %s319 = ssub.s32 %s15, 2
        // Predicated region
        $region57: #{tpu_custom_call.1} parent=55 // pred_check
          %p320 = pneg %p109
        $region58: #{tpu_custom_call.1} parent=55 // pred_check_branch
          %322 = sbr.rel (%p320) target = $region60
        $region59: #{tpu_custom_call.1} parent=55 // pred_region
          %s323 = sand.u32 %s94, 1
          %s324 = scalar_lea.sflag [#allocation7], %s323
          %s325 = sand.u32 %s94, 1
          %s326 = smul.addr %s325, 2
          %s327 = scalar_lea.vmem [#allocation10], %s326
          %328 = dma.done %s324, 32
        $region60: #{tpu_custom_call.1} parent=55 // pred_fallthru
          _
      $region56: #{tpu_custom_call.1} parent=5 // pred_fallthru
        _
    $region6: #{tpu_custom_call.1} parent=1 // loop_footer
      %s19 = sadd.s32 1, %s15
    $region7: #{tpu_custom_call.1} parent=1 // loop_footer_branch
      %14 = sbr.rel target = $region3
    $region8: #{tpu_custom_call.1} parent=1 // loop_exit
      _
    %329 = vsyncpa [#allocation6], 1
    %s330 = scalar_lea.sflag [#allocation6], 1
    %331 = vsyncpa %s330, 1
    %332 = vsyncpa [#allocation9], 1
    %333 = vsyncpa [#allocation7], 1
    %s334 = scalar_lea.sflag [#allocation7], 1
    %335 = vsyncpa %s334, 1

</llo_original>
